<compile_context>
chip_gen: v6e
topology: v6e:2x2x1
jax: 0.10.0
libtpu: 0.0.40
codegen_flags: <defaults>
</compile_context>

<pallas_src>
import functools
import math

import jax
import jax.numpy as jnp
from jax.experimental import pallas as pl
from jax.experimental.pallas import tpu as pltpu


def _mha_map_kernel(q_ref, kp_ref, wq_ref, bq_ref, out_ref, *,
                    num_heads, hw, hw_pad):
    """One (batch, Q-tile) grid step.

    q_ref:   (1, TQ, D)       bf16      queries
    kp_ref:  (1, N, c, HWp)   bf16      k projection (bias folded in), per batch
    wq_ref:  (N, D, c)        bf16      q_linear weight, head-split, *normalize_fact
    bq_ref:  (N, 1, c)        f32       q_linear bias, head-split, *normalize_fact
    out_ref: (1, TQ, N*HWp)   out_dtype joint-softmax attention map
    """
    q = q_ref[0]                                                    # (TQ, D) bf16

    # Pass 1: per-head scores, exp'd against the head-local row max while hot.
    # Stores are lane-dense at 128-aligned static offsets (hw_pad % 128 == 0).
    m_heads, l_heads = [], []
    for n in range(num_heads):
        qp_n = (jnp.dot(q, wq_ref[n], preferred_element_type=jnp.float32)
                + bq_ref[n]).astype(jnp.bfloat16)                   # (TQ, c)
        s_n = jnp.dot(qp_n, kp_ref[0, n],
                      preferred_element_type=jnp.float32)           # (TQ, HWp) f32
        if hw_pad != hw:                                            # mask pad lanes
            col = jax.lax.broadcasted_iota(jnp.int32, s_n.shape, 1)
            s_n = jnp.where(col < hw, s_n, -jnp.inf)
        m_n = jnp.max(s_n, axis=-1, keepdims=True)                  # (TQ, 1)
        p_n = jnp.exp(s_n - m_n)                                    # pad lanes -> 0
        m_heads.append(m_n)
        l_heads.append(jnp.sum(p_n, axis=-1, keepdims=True))
        out_ref[0, :, pl.ds(n * hw_pad, hw_pad)] = p_n.astype(out_ref.dtype)

    # Log-sum-exp merge of the per-head partial softmaxes (tiny (TQ,1) vectors).
    m_all = m_heads[0]
    for n in range(1, num_heads):
        m_all = jnp.maximum(m_all, m_heads[n])
    alphas = [jnp.exp(m_heads[n] - m_all) for n in range(num_heads)]
    l_all = alphas[0] * l_heads[0]
    for n in range(1, num_heads):
        l_all = l_all + alphas[n] * l_heads[n]
    inv_l = pl.reciprocal(l_all, approx=True)                       # EUP slot

    # Pass 2: one reload + rescale + store per head => joint softmax over the
    # flattened (heads, H, W) axes, matching torch's flatten(2).
    for n in range(num_heads):
        scale = alphas[n] * inv_l                                   # (TQ, 1) f32
        lo = n * hw_pad
        p_n = out_ref[0, :, pl.ds(lo, hw_pad)].astype(jnp.float32)
        out_ref[0, :, pl.ds(lo, hw_pad)] = (p_n * scale).astype(out_ref.dtype)


def mh_attention_map(q, k, wq, bq, wk, bk, *, num_heads,
                     out_dtype=jnp.bfloat16, q_tile=128):
    """q: (B, Q, D); k: (B, D, H, W) NCHW; wq/wk: (D, hidden); bq/bk: (hidden,)."""
    B, Q, D = q.shape
    _, Dk, H, W = k.shape
    assert Dk == D
    hidden = wq.shape[1]
    assert hidden % num_heads == 0
    c = hidden // num_heads
    norm_fact = float(hidden / num_heads) ** (-0.5)
    HW = H * W
    HWp = -(-HW // 128) * 128                      # lane-dense pad (review item 6)
    n_lanes = num_heads * HWp

    # --- k projection hoisted to XLA (1x1 conv == channel matmul), f32 --------
    kp = jnp.einsum('dc,bdp->bcp', wk, k.reshape(B, D, HW)) + bk[None, :, None]
    if HWp != HW:
        kp = jnp.pad(kp, ((0, 0), (0, 0), (0, HWp - HW)))
    kp = kp.reshape(B, num_heads, c, HWp).astype(jnp.bfloat16)

    # --- q-side params: fold normalize_fact, split per head -------------------
    wq_h = (wq * norm_fact).reshape(D, num_heads, c).transpose(1, 0, 2)
    wq_h = wq_h.astype(jnp.bfloat16)                               # (N, D, c)
    bq_h = (bq * norm_fact).reshape(num_heads, 1, c).astype(jnp.float32)

    # --- VMEM budget & Q tiling (review items 3 and 5) -------------------------
    def _ceil_to(x, m):
        return -(-x // m) * m

    out_bytes = jnp.dtype(out_dtype).itemsize
    try:
        vmem_cap = int(pltpu.get_tpu_info().vmem_capacity_bytes)
    except Exception:
        vmem_cap = 64 * 2**20                       # conservative (v7x per-TC)
    vmem_limit = max(32 * 2**20, min(vmem_cap * 3 // 4, 56 * 2**20))
    budget = int(vmem_limit * 0.7)

    def _vmem_footprint(tq):
        out_b = 2 * tq * n_lanes * out_bytes        # double-buffered output block
        kp_b = 2 * num_heads * c * HWp * 2          # double-buffered kp (bf16)
        q_b = 2 * tq * D * 2
        w_b = 2 * (num_heads * D * c * 2 + num_heads * c * 4)
        tmp_b = 3 * tq * HWp * 4                    # in-flight f32 per-head temps
        return out_b + kp_b + q_b + w_b + tmp_b

    TQ = max(8, (min(q_tile, _ceil_to(Q, 8)) // 8) * 8)
    while TQ > 8 and _vmem_footprint(TQ) > budget:
        TQ = max(8, ((TQ // 2) // 8) * 8)
    nsteps = _ceil_to(Q, TQ) // TQ                  # balance tiles (>= 2 steps if Q large)
    TQ = max(8, min(TQ, _ceil_to(_ceil_to(Q, nsteps) // nsteps, 8)))
    Qp = _ceil_to(Q, TQ)

    q_bf = q.astype(jnp.bfloat16)
    if Qp != Q:
        q_bf = jnp.pad(q_bf, ((0, 0), (0, Qp - Q), (0, 0)))

    kernel = functools.partial(_mha_map_kernel, num_heads=num_heads,
                               hw=HW, hw_pad=HWp)

    # NOTE: constant-index inputs (wq_h, bq_h, kp) could be single-buffered with
    # pipeline_mode=pl.Buffered(1) to save VMEM on v7x; left default here.
    out_flat = pl.pallas_call(
        kernel,
        out_shape=jax.ShapeDtypeStruct((B, Qp, n_lanes), out_dtype),
        grid_spec=pltpu.PrefetchScalarGridSpec(
            num_scalar_prefetch=0,
            grid=(B, Qp // TQ),
            in_specs=[
                pl.BlockSpec((1, TQ, D), lambda b, qi: (b, qi, 0)),          # q
                pl.BlockSpec((1, num_heads, c, HWp),
                             lambda b, qi: (b, 0, 0, 0)),                    # kp
                pl.BlockSpec((num_heads, D, c), lambda b, qi: (0, 0, 0)),    # Wq (scaled)
                pl.BlockSpec((num_heads, 1, c), lambda b, qi: (0, 0, 0)),    # bq (scaled)
            ],
            out_specs=pl.BlockSpec((1, TQ, n_lanes), lambda b, qi: (b, qi, 0)),
        ),
        # kp is computed outside the kernel -> no cross-step state -> both the
        # batch and Q axes can shard across TensorCores.
        compiler_params=pltpu.CompilerParams(
            dimension_semantics=("parallel", "parallel"),
            vmem_limit_bytes=int(vmem_limit)),
    )(q_bf, kp, wq_h, bq_h)

    # (B, Qp, N*HWp) -> strip Q/HW padding -> (B, Q, N, H, W) (torch view_as).
    out = out_flat.reshape(B, Qp, num_heads, HWp)[:, :Q, :, :HW]
    return out.reshape(B, Q, num_heads, H, W)


def _xavier_uniform(key, out_dim, in_dim, dtype=jnp.float32):
    # Matches nn.init.xavier_uniform_ for a (out, in) Linear weight.
    bound = math.sqrt(6.0 / (in_dim + out_dim))
    return jax.random.uniform(key, (out_dim, in_dim), dtype, -bound, bound)


def _reference(q, k, wq, bq, wk, bk, num_heads):
    # Pure-JAX f32 reference mirroring the PyTorch forward.
    B, Q, D = q.shape
    hidden = wq.shape[1]
    c = hidden // num_heads
    fact = float(hidden / num_heads) ** (-0.5)
    qp = q @ wq + bq                                              # (B, Q, hidden)
    kp = jnp.einsum('bdhw,dc->bchw', k, wk) + bk[None, :, None, None]
    qh = qp.reshape(B, Q, num_heads, c)
    kh = kp.reshape(B, num_heads, c, k.shape[-2], k.shape[-1])
    w = jnp.einsum('bqnc,bnchw->bqnhw', qh * fact, kh)
    wf = jax.nn.softmax(w.reshape(B, Q, -1), axis=-1)
    return wf.reshape(w.shape)


def _run_case(key, *, B, Q, D, hidden, num_heads, H, W, out_dtype, atol, rtol,
              random_bias=False):
    k_q, k_k, k_wq, k_wk, k_b = jax.random.split(key, 5)
    q_in = jax.random.normal(k_q, (B, Q, D), jnp.float32)
    k_in = jax.random.normal(k_k, (B, D, H, W), jnp.float32)
    # PyTorch stores (out, in); keep (in, out) = transpose for right-mult.
    wq = _xavier_uniform(k_wq, hidden, D).T                       # (D, hidden)
    wk = _xavier_uniform(k_wk, hidden, D).T                       # (D, hidden)
    if random_bias:
        bq, bk = 0.1 * jax.random.normal(k_b, (2, hidden), jnp.float32)
    else:                                                          # matches __init__
        bq = jnp.zeros((hidden,), jnp.float32)
        bk = jnp.zeros((hidden,), jnp.float32)

    out = mh_attention_map(q_in, k_in, wq, bq, wk, bk,
                           num_heads=num_heads, out_dtype=out_dtype)
    out = jax.block_until_ready(out)
    ref = _reference(q_in, k_in, wq, bq, wk, bk, num_heads)
    assert out.shape == (B, Q, num_heads, H, W)
    assert jnp.allclose(out.astype(jnp.float32), ref, atol=atol, rtol=rtol), \
        "mismatch vs reference"


if __name__ == "__main__":
    key = jax.random.PRNGKey(0)
    k1, k2, k3 = jax.random.split(key, 3)

    # Primary small config (HW = 256, lane-aligned): f32 output, tight check.
    _run_case(k1, B=2, Q=8, D=4, hidden=32, num_heads=2, H=16, W=16,
              out_dtype=jnp.float32, atol=2e-3, rtol=2e-2)
    # Same shapes with the default bf16 output path.
    _run_case(k2, B=2, Q=8, D=4, hidden=32, num_heads=2, H=16, W=16,
              out_dtype=jnp.bfloat16, atol=4e-3, rtol=4e-2)
    # Ragged config exercising HW->128 lane padding and Q->tile row padding,
    # plus the bias path.
    _run_case(k3, B=1, Q=5, D=4, hidden=32, num_heads=2, H=6, W=6,
              out_dtype=jnp.float32, atol=2e-3, rtol=2e-2, random_bias=True)

    print("KERNEL_OK")
</pallas_src>

<mosaic_0001>
module attributes {stable_mosaic.version = 11 : i64} {
  func.func @_mha_map_kernel(%arg0: i32, %arg1: i32, %arg2: memref<1x8x4xbf16, #tpu.memory_space<vmem>>, %arg3: memref<1x2x16x256xbf16, #tpu.memory_space<vmem>>, %arg4: memref<2x4x16xbf16, #tpu.memory_space<vmem>>, %arg5: memref<2x1x16xf32, #tpu.memory_space<vmem>>, %arg6: memref<1x8x512xf32, #tpu.memory_space<vmem>>) attributes {dimension_semantics = [#tpu.dimension_semantics<parallel>, #tpu.dimension_semantics<parallel>], iteration_bounds = array<i64: 2, 1>, scalar_prefetch = 0 : i64, scratch_operands = 0 : i64, tpu.core_type = #tpu.core_type<tc>, window_params = [{transform_indices = @transform_0, window_bounds = array<i64: 1, 8, 4>}, {transform_indices = @transform_1, window_bounds = array<i64: 1, 2, 16, 256>}, {pipeline_mode = #tpu.pipeline_mode<synchronous>, transform_indices = @transform_2, window_bounds = array<i64: 2, 4, 16>}, {pipeline_mode = #tpu.pipeline_mode<synchronous>, transform_indices = @transform_3, window_bounds = array<i64: 2, 1, 16>}, {transform_indices = @transform_4, window_bounds = array<i64: 1, 8, 512>}]} {
    %c0 = arith.constant 0 : index
    %c0_0 = arith.constant 0 : index
    %c0_1 = arith.constant 0 : index
    %0 = vector.load %arg2[%c0, %c0_0, %c0_1] : memref<1x8x4xbf16, #tpu.memory_space<vmem>>, vector<1x8x4xbf16>
    %1 = vector.shape_cast %0 : vector<1x8x4xbf16> to vector<8x4xbf16>
    %c0_2 = arith.constant 0 : index
    %c0_3 = arith.constant 0 : index
    %c0_4 = arith.constant 0 : index
    %2 = vector.load %arg4[%c0_2, %c0_3, %c0_4] : memref<2x4x16xbf16, #tpu.memory_space<vmem>>, vector<1x4x16xbf16>
    %3 = vector.shape_cast %2 : vector<1x4x16xbf16> to vector<4x16xbf16>
    %cst = arith.constant dense<0.000000e+00> : vector<8x16xf32>
    %4 = tpu.matmul %1, %3, %cst {dimension_numbers = #tpu.dot_dimension_numbers<[1], [0], [0], [1], [0, 0, 1, 1], [], []>} : vector<8x4xbf16>, vector<4x16xbf16>, vector<8x16xf32> -> vector<8x16xf32>
    %c0_5 = arith.constant 0 : index
    %c0_6 = arith.constant 0 : index
    %c0_7 = arith.constant 0 : index
    %5 = vector.load %arg5[%c0_5, %c0_6, %c0_7] : memref<2x1x16xf32, #tpu.memory_space<vmem>>, vector<1x1x16xf32>
    %6 = vector.shape_cast %5 : vector<1x1x16xf32> to vector<1x16xf32>
    %7 = vector.broadcast %6 : vector<1x16xf32> to vector<8x16xf32>
    %8 = arith.addf %4, %7 : vector<8x16xf32>
    %9 = arith.truncf %8 : vector<8x16xf32> to vector<8x16xbf16>
    %c0_8 = arith.constant 0 : index
    %c0_9 = arith.constant 0 : index
    %c0_10 = arith.constant 0 : index
    %c0_11 = arith.constant 0 : index
    %10 = vector.load %arg3[%c0_8, %c0_9, %c0_10, %c0_11] : memref<1x2x16x256xbf16, #tpu.memory_space<vmem>>, vector<1x1x16x256xbf16>
    %11 = vector.shape_cast %10 : vector<1x1x16x256xbf16> to vector<16x256xbf16>
    %cst_12 = arith.constant dense<0.000000e+00> : vector<8x256xf32>
    %12 = tpu.matmul %9, %11, %cst_12 {dimension_numbers = #tpu.dot_dimension_numbers<[1], [0], [0], [1], [0, 0, 1, 1], [], []>} : vector<8x16xbf16>, vector<16x256xbf16>, vector<8x256xf32> -> vector<8x256xf32>
    %cst_13 = arith.constant dense<0xFF800000> : vector<8xf32>
    %13 = vector.multi_reduction <maximumf>, %12, %cst_13 [1] : vector<8x256xf32> to vector<8xf32>
    %14 = vector.shape_cast %13 : vector<8xf32> to vector<8x1xf32>
    %15 = vector.broadcast %14 : vector<8x1xf32> to vector<8x256xf32>
    %16 = arith.subf %12, %15 : vector<8x256xf32>
    %17 = math.exp %16 : vector<8x256xf32>
    %cst_14 = arith.constant dense<0.000000e+00> : vector<8xf32>
    %18 = vector.multi_reduction <add>, %17, %cst_14 [1] : vector<8x256xf32> to vector<8xf32>
    %19 = vector.shape_cast %18 : vector<8xf32> to vector<8x1xf32>
    %c0_15 = arith.constant 0 : index
    %c0_16 = arith.constant 0 : index
    %c0_17 = arith.constant 0 : index
    %20 = vector.load %arg6[%c0_15, %c0_16, %c0_17] : memref<1x8x512xf32, #tpu.memory_space<vmem>>, vector<1x8x256xf32>
    %21 = vector.shape_cast %20 : vector<1x8x256xf32> to vector<8x256xf32>
    %22 = vector.shape_cast %17 : vector<8x256xf32> to vector<1x8x256xf32>
    tpu.vector_store %arg6[%c0_15, %c0_16, %c0_17], %22 {strides = array<i32>} : memref<1x8x512xf32, #tpu.memory_space<vmem>>, vector<1x8x256xf32>,
    %c1 = arith.constant 1 : index
    %c0_18 = arith.constant 0 : index
    %c0_19 = arith.constant 0 : index
    %23 = vector.load %arg4[%c1, %c0_18, %c0_19] : memref<2x4x16xbf16, #tpu.memory_space<vmem>>, vector<1x4x16xbf16>
    %24 = vector.shape_cast %23 : vector<1x4x16xbf16> to vector<4x16xbf16>
    %cst_20 = arith.constant dense<0.000000e+00> : vector<8x16xf32>
    %25 = tpu.matmul %1, %24, %cst_20 {dimension_numbers = #tpu.dot_dimension_numbers<[1], [0], [0], [1], [0, 0, 1, 1], [], []>} : vector<8x4xbf16>, vector<4x16xbf16>, vector<8x16xf32> -> vector<8x16xf32>
    %c1_21 = arith.constant 1 : index
    %c0_22 = arith.constant 0 : index
    %c0_23 = arith.constant 0 : index
    %26 = vector.load %arg5[%c1_21, %c0_22, %c0_23] : memref<2x1x16xf32, #tpu.memory_space<vmem>>, vector<1x1x16xf32>
    %27 = vector.shape_cast %26 : vector<1x1x16xf32> to vector<1x16xf32>
    %28 = vector.broadcast %27 : vector<1x16xf32> to vector<8x16xf32>
    %29 = arith.addf %25, %28 : vector<8x16xf32>
    %30 = arith.truncf %29 : vector<8x16xf32> to vector<8x16xbf16>
    %c0_24 = arith.constant 0 : index
    %c1_25 = arith.constant 1 : index
    %c0_26 = arith.constant 0 : index
    %c0_27 = arith.constant 0 : index
    %31 = vector.load %arg3[%c0_24, %c1_25, %c0_26, %c0_27] : memref<1x2x16x256xbf16, #tpu.memory_space<vmem>>, vector<1x1x16x256xbf16>
    %32 = vector.shape_cast %31 : vector<1x1x16x256xbf16> to vector<16x256xbf16>
    %cst_28 = arith.constant dense<0.000000e+00> : vector<8x256xf32>
    %33 = tpu.matmul %30, %32, %cst_28 {dimension_numbers = #tpu.dot_dimension_numbers<[1], [0], [0], [1], [0, 0, 1, 1], [], []>} : vector<8x16xbf16>, vector<16x256xbf16>, vector<8x256xf32> -> vector<8x256xf32>
    %cst_29 = arith.constant dense<0xFF800000> : vector<8xf32>
    %34 = vector.multi_reduction <maximumf>, %33, %cst_29 [1] : vector<8x256xf32> to vector<8xf32>
    %35 = vector.shape_cast %34 : vector<8xf32> to vector<8x1xf32>
    %36 = vector.broadcast %35 : vector<8x1xf32> to vector<8x256xf32>
    %37 = arith.subf %33, %36 : vector<8x256xf32>
    %38 = math.exp %37 : vector<8x256xf32>
    %cst_30 = arith.constant dense<0.000000e+00> : vector<8xf32>
    %39 = vector.multi_reduction <add>, %38, %cst_30 [1] : vector<8x256xf32> to vector<8xf32>
    %40 = vector.shape_cast %39 : vector<8xf32> to vector<8x1xf32>
    %c0_31 = arith.constant 0 : index
    %c0_32 = arith.constant 0 : index
    %c256 = arith.constant 256 : index
    %41 = vector.load %arg6[%c0_31, %c0_32, %c256] : memref<1x8x512xf32, #tpu.memory_space<vmem>>, vector<1x8x256xf32>
    %42 = vector.shape_cast %41 : vector<1x8x256xf32> to vector<8x256xf32>
    %43 = vector.shape_cast %38 : vector<8x256xf32> to vector<1x8x256xf32>
    tpu.vector_store %arg6[%c0_31, %c0_32, %c256], %43 {strides = array<i32>} : memref<1x8x512xf32, #tpu.memory_space<vmem>>, vector<1x8x256xf32>,
    %44 = arith.maximumf %14, %35 : vector<8x1xf32>
    %45 = arith.subf %14, %44 : vector<8x1xf32>
    %46 = math.exp %45 : vector<8x1xf32>
    %47 = arith.subf %35, %44 : vector<8x1xf32>
    %48 = math.exp %47 : vector<8x1xf32>
    %49 = arith.mulf %46, %19 : vector<8x1xf32>
    %50 = arith.mulf %48, %40 : vector<8x1xf32>
    %51 = arith.addf %49, %50 : vector<8x1xf32>
    %52 = tpu.reciprocal %51 {approx = true} : vector<8x1xf32> -> vector<8x1xf32>
    %53 = arith.mulf %46, %52 : vector<8x1xf32>
    %c0_33 = arith.constant 0 : index
    %c0_34 = arith.constant 0 : index
    %c0_35 = arith.constant 0 : index
    %54 = vector.load %arg6[%c0_33, %c0_34, %c0_35] : memref<1x8x512xf32, #tpu.memory_space<vmem>>, vector<1x8x256xf32>
    %55 = vector.shape_cast %54 : vector<1x8x256xf32> to vector<8x256xf32>
    %56 = vector.broadcast %53 : vector<8x1xf32> to vector<8x256xf32>
    %57 = arith.mulf %55, %56 : vector<8x256xf32>
    %c0_36 = arith.constant 0 : index
    %c0_37 = arith.constant 0 : index
    %c0_38 = arith.constant 0 : index
    %58 = vector.load %arg6[%c0_36, %c0_37, %c0_38] : memref<1x8x512xf32, #tpu.memory_space<vmem>>, vector<1x8x256xf32>
    %59 = vector.shape_cast %58 : vector<1x8x256xf32> to vector<8x256xf32>
    %60 = vector.shape_cast %57 : vector<8x256xf32> to vector<1x8x256xf32>
    tpu.vector_store %arg6[%c0_36, %c0_37, %c0_38], %60 {strides = array<i32>} : memref<1x8x512xf32, #tpu.memory_space<vmem>>, vector<1x8x256xf32>,
    %61 = arith.mulf %48, %52 : vector<8x1xf32>
    %c0_39 = arith.constant 0 : index
    %c0_40 = arith.constant 0 : index
    %c256_41 = arith.constant 256 : index
    %62 = vector.load %arg6[%c0_39, %c0_40, %c256_41] : memref<1x8x512xf32, #tpu.memory_space<vmem>>, vector<1x8x256xf32>
    %63 = vector.shape_cast %62 : vector<1x8x256xf32> to vector<8x256xf32>
    %64 = vector.broadcast %61 : vector<8x1xf32> to vector<8x256xf32>
    %65 = arith.mulf %63, %64 : vector<8x256xf32>
    %c0_42 = arith.constant 0 : index
    %c0_43 = arith.constant 0 : index
    %c256_44 = arith.constant 256 : index
    %66 = vector.load %arg6[%c0_42, %c0_43, %c256_44] : memref<1x8x512xf32, #tpu.memory_space<vmem>>, vector<1x8x256xf32>
    %67 = vector.shape_cast %66 : vector<1x8x256xf32> to vector<8x256xf32>
    %68 = vector.shape_cast %65 : vector<8x256xf32> to vector<1x8x256xf32>
    tpu.vector_store %arg6[%c0_42, %c0_43, %c256_44], %68 {strides = array<i32>} : memref<1x8x512xf32, #tpu.memory_space<vmem>>, vector<1x8x256xf32>,
    return
  }
  func.func @transform_0(%arg0: i32, %arg1: i32) -> (i32, i32, i32) {
    %c0_i32 = arith.constant 0 : i32
    %c0_i32_0 = arith.constant 0 : i32
    return %arg0, %arg1, %c0_i32 : i32, i32, i32
  }
  func.func @transform_1(%arg0: i32, %arg1: i32) -> (i32, i32, i32, i32) {
    %c0_i32 = arith.constant 0 : i32
    %c0_i32_0 = arith.constant 0 : i32
    %c0_i32_1 = arith.constant 0 : i32
    %c0_i32_2 = arith.constant 0 : i32
    return %arg0, %c0_i32, %c0_i32_0, %c0_i32_1 : i32, i32, i32, i32
  }
  func.func @transform_2(%arg0: i32, %arg1: i32) -> (i32, i32, i32) {
    %c0_i32 = arith.constant 0 : i32
    %c0_i32_0 = arith.constant 0 : i32
    %c0_i32_1 = arith.constant 0 : i32
    %c0_i32_2 = arith.constant 0 : i32
    return %c0_i32, %c0_i32_0, %c0_i32_1 : i32, i32, i32
  }
  func.func @transform_3(%arg0: i32, %arg1: i32) -> (i32, i32, i32) {
    %c0_i32 = arith.constant 0 : i32
    %c0_i32_0 = arith.constant 0 : i32
    %c0_i32_1 = arith.constant 0 : i32
    %c0_i32_2 = arith.constant 0 : i32
    return %c0_i32, %c0_i32_0, %c0_i32_1 : i32, i32, i32
  }
  func.func @transform_4(%arg0: i32, %arg1: i32) -> (i32, i32, i32) {
    %c0_i32 = arith.constant 0 : i32
    %c0_i32_0 = arith.constant 0 : i32
    return %arg0, %arg1, %c0_i32 : i32, i32, i32
  }
}

</mosaic_0001>

<llo_original>
// kernel: tpu_custom_call.1
$region0: #{tpu_custom_call.1}
  #allocation0 [shape = 'u32[]', space=smem, size = 0x4, offset = 0x4, fixed_abs, tag = 'smem constant byte address 0x4 - core index']
  #allocation1 [shape = 'u32[144,128]{1,0:T(1,128)}', space=vmem, size = 0x12000, scoped, tag = 'internal scratch']
  %s0 = inlined_call_operand.vmem [shape: bf16[2,8,4], index: 0, kind: input, shape index: {}]
  %s1 = inlined_call_operand.hbm [shape: bf16[2,2,16,256], index: 1, kind: input, shape index: {}]
  %s2 = inlined_call_operand.vmem [shape: bf16[2,4,16], index: 2, kind: input, shape index: {}]
  %s3 = inlined_call_operand.vmem [shape: f32[2,1,16], index: 3, kind: input, shape index: {}]
  %s4 = inlined_call_operand.hbm [shape: f32[2,8,512], index: 4, kind: output, shape index: {}]
  %s5 = sld [smem:[#allocation0]]
  $region53: #{tpu_custom_call.1} parent=0
    _
  %s7 = ssub.s32 1, %s5
  %s8 = scalar_select 0, %s7, %s5
  $region1: #{tpu_custom_call.1} parent=0
    #allocation2 [shape = 'u8[32768]{0}', space=vmem, size = 0x8000, scoped, tag = 'input window, operand 1']
    #allocation3 [shape = 's32[2]{0}', space=sflag, size = 0x8, scoped, tag = 'scoped memory for tpu_custom_call.1']
    #allocation4 [shape = 's32[2]{0}', space=sflag, size = 0x8, scoped, tag = 'scoped memory for tpu_custom_call.1']
    #allocation5 [shape = 'u8[32768]{0}', space=vmem, size = 0x8000, scoped, tag = 'output window, operand 0']
    %9 = vsyncpa [#allocation3], 0
    %s10 = scalar_lea.sflag [#allocation3], 1
    %11 = vsyncpa %s10, 0
    %12 = vsyncpa [#allocation4], 0
    %s13 = scalar_lea.sflag [#allocation4], 1
    %14 = vsyncpa %s13, 0
    loop: start=0, step=1, limit=4
    $region2: #{tpu_custom_call.1} parent=1 // loop_pre_header
      _
    $region3: #{tpu_custom_call.1} parent=1 // loop_header
      %s16 = sphi 0, %s20
      %p17 = scmp.ge.s32.totalorder %s16, 4
      %s23 = sphi 0, %s35
      %s24 = sphi 0, %s31
      %s25 = sphi 0, %s23
      %s26 = sphi 0, %s24
      %s27 = sphi 0, %s25
      %s28 = sphi 0, %s26
      %s40 = sphi 0, %s42
      %s43 = sphi 0, %s40
      %s44 = sphi 0, %s43
      %s60 = sphi 0, %s44
      %s66 = sphi 0, %s68
      %s69 = sphi 0, %s66
      %s70 = sphi 0, %s69
      %s86 = sphi 0, %s70
      %s90 = sphi 0, %s90
      %s92 = sphi 0, %s90
      %s93 = sphi 0, %s92
      %s107 = sphi 0, %s93
      %s111 = sphi 0, %s111
      %s113 = sphi 0, %s111
      %s114 = sphi 0, %s113
      %s128 = sphi 0, %s114
      %s136 = sphi 0, %s138
      %s139 = sphi 0, %s136
      %s140 = sphi 0, %s139
      %s156 = sphi 0, %s140
    $region4: #{tpu_custom_call.1} parent=1 // loop_header_branch
      %19 = sbr.rel (%p17) target = $region8
    $region5: #{tpu_custom_call.1} parent=1 // loop_body
      %s21 = ssub.s32 %s16, 1
      %s22 = ssub.s32 %s16, 2
      %s29 = sadd.s32 1, %s24
      %p30 = scmp.ge.s32.totalorder %s29, 1
      %s31 = scalar_select %p30, 0, %s29
      %s32 = sadd.s32 1, %s23
      %s33 = scalar_select %p30, %s32, %s23
      %p34 = scmp.ge.s32.totalorder %s33, 2
      %s35 = scalar_select %p34, 0, %s33
      %s36 = ssub.s32 %s23, %s35
      %s37 = ssub.s32 %s24, %s31
      %s38 = sor.u32 %s36, %s37
      %p39 = scmp.eq.s32.totalorder %s38, 0
      %s41 = sadd.s32 %s40, 1
      %s42 = scalar_select %p39, %s40, %s41
      %p45 = pneg %p39
      %p46 = scmp.eq.s32.totalorder %s16, 1
      %p47 = por %p45, %p46
      %p48 = scmp.ne.s32.totalorder %s40, %s43
      %p49 = scmp.eq.s32.totalorder %s16, 0
      %p50 = por %p48, %p49
      %p51 = scmp.ne.s32.totalorder %s40, %s43
      %p52 = scmp.eq.s32.totalorder %s21, 1
      %p53 = por %p51, %p52
      %p54 = scmp.ne.s32.totalorder %s43, %s44
      %p55 = scmp.eq.s32.totalorder %s21, 0
      %p56 = por %p54, %p55
      %p57 = scmp.ne.s32.totalorder %s43, %s44
      %p58 = scmp.eq.s32.totalorder %s22, 1
      %p59 = por %p57, %p58
      %p61 = scmp.ne.s32.totalorder %s44, %s60
      %p62 = scmp.eq.s32.totalorder %s22, 0
      %p63 = por %p61, %p62
      %s64 = ssub.s32 %s23, %s35
      %p65 = scmp.eq.s32.totalorder %s64, 0
      %s67 = sadd.s32 %s66, 1
      %s68 = scalar_select %p65, %s66, %s67
      %p71 = pneg %p65
      %p72 = scmp.eq.s32.totalorder %s16, 1
      %p73 = por %p71, %p72
      %p74 = scmp.ne.s32.totalorder %s66, %s69
      %p75 = scmp.eq.s32.totalorder %s16, 0
      %p76 = por %p74, %p75
      %p77 = scmp.ne.s32.totalorder %s66, %s69
      %p78 = scmp.eq.s32.totalorder %s21, 1
      %p79 = por %p77, %p78
      %p80 = scmp.ne.s32.totalorder %s69, %s70
      %p81 = scmp.eq.s32.totalorder %s21, 0
      %p82 = por %p80, %p81
      %p83 = scmp.ne.s32.totalorder %s69, %s70
      %p84 = scmp.eq.s32.totalorder %s22, 1
      %p85 = por %p83, %p84
      %p87 = scmp.ne.s32.totalorder %s70, %s86
      %p88 = scmp.eq.s32.totalorder %s22, 0
      %p89 = por %p87, %p88
      %s91 = sadd.s32 %s90, 1
      %p94 = scmp.eq.s32.totalorder %s16, 1
      %p95 = scmp.ne.s32.totalorder %s90, %s92
      %p96 = scmp.eq.s32.totalorder %s16, 0
      %p97 = por %p95, %p96
      %p98 = scmp.ne.s32.totalorder %s90, %s92
      %p99 = scmp.eq.s32.totalorder %s21, 1
      %p100 = por %p98, %p99
      %p101 = scmp.ne.s32.totalorder %s92, %s93
      %p102 = scmp.eq.s32.totalorder %s21, 0
      %p103 = por %p101, %p102
      %p104 = scmp.ne.s32.totalorder %s92, %s93
      %p105 = scmp.eq.s32.totalorder %s22, 1
      %p106 = por %p104, %p105
      %p108 = scmp.ne.s32.totalorder %s93, %s107
      %p109 = scmp.eq.s32.totalorder %s22, 0
      %p110 = por %p108, %p109
      %s112 = sadd.s32 %s111, 1
      %p115 = scmp.eq.s32.totalorder %s16, 1
      %p116 = scmp.ne.s32.totalorder %s111, %s113
      %p117 = scmp.eq.s32.totalorder %s16, 0
      %p118 = por %p116, %p117
      %p119 = scmp.ne.s32.totalorder %s111, %s113
      %p120 = scmp.eq.s32.totalorder %s21, 1
      %p121 = por %p119, %p120
      %p122 = scmp.ne.s32.totalorder %s113, %s114
      %p123 = scmp.eq.s32.totalorder %s21, 0
      %p124 = por %p122, %p123
      %p125 = scmp.ne.s32.totalorder %s113, %s114
      %p126 = scmp.eq.s32.totalorder %s22, 1
      %p127 = por %p125, %p126
      %p129 = scmp.ne.s32.totalorder %s114, %s128
      %p130 = scmp.eq.s32.totalorder %s22, 0
      %p131 = por %p129, %p130
      %s132 = ssub.s32 %s23, %s35
      %s133 = ssub.s32 %s24, %s31
      %s134 = sor.u32 %s132, %s133
      %p135 = scmp.eq.s32.totalorder %s134, 0
      %s137 = sadd.s32 %s136, 1
      %s138 = scalar_select %p135, %s136, %s137
      %p141 = pneg %p135
      %p142 = scmp.eq.s32.totalorder %s16, 1
      %p143 = por %p141, %p142
      %p144 = scmp.ne.s32.totalorder %s136, %s139
      %p145 = scmp.eq.s32.totalorder %s16, 0
      %p146 = por %p144, %p145
      %p147 = scmp.ne.s32.totalorder %s136, %s139
      %p148 = scmp.eq.s32.totalorder %s21, 1
      %p149 = por %p147, %p148
      %p150 = scmp.ne.s32.totalorder %s139, %s140
      %p151 = scmp.eq.s32.totalorder %s21, 0
      %p152 = por %p150, %p151
      %p153 = scmp.ne.s32.totalorder %s139, %s140
      %p154 = scmp.eq.s32.totalorder %s22, 1
      %p155 = por %p153, %p154
      %p157 = scmp.ne.s32.totalorder %s140, %s156
      %p158 = scmp.eq.s32.totalorder %s22, 0
      %p159 = por %p157, %p158
      %p160 = scmp.le.s32.totalorder 1, %s16
      %p161 = scmp.lt.s32.totalorder %s16, 3
      %p162 = pnand %p160, %p161
      %p163 = pneg %p162
      // Predicated region
      $region9: #{tpu_custom_call.1} parent=5 // pred_check
        _
      $region10: #{tpu_custom_call.1} parent=5 // pred_check_branch
        %165 = sbr.rel (%p162) target = $region12
      $region11: #{tpu_custom_call.1} parent=5 // pred_region
        %s166 = ssub.s32 %s16, 1
        // Predicated region
        $region13: #{tpu_custom_call.1} parent=11 // pred_check
          %p167 = pneg %p103
        $region14: #{tpu_custom_call.1} parent=11 // pred_check_branch
          %169 = sbr.rel (%p167) target = $region16
        $region15: #{tpu_custom_call.1} parent=11 // pred_region
          _
        $region16: #{tpu_custom_call.1} parent=11 // pred_fallthru
          _
        // Predicated region
        $region17: #{tpu_custom_call.1} parent=11 // pred_check
          %p170 = pneg %p124
        $region18: #{tpu_custom_call.1} parent=11 // pred_check_branch
          %172 = sbr.rel (%p170) target = $region20
        $region19: #{tpu_custom_call.1} parent=11 // pred_region
          _
        $region20: #{tpu_custom_call.1} parent=11 // pred_fallthru
          _
      $region12: #{tpu_custom_call.1} parent=5 // pred_fallthru
        _
      %p173 = scmp.lt.s32.totalorder %s16, 2
      // Predicated region
      $region21: #{tpu_custom_call.1} parent=5 // pred_check
        %p174 = pneg %p173
      $region22: #{tpu_custom_call.1} parent=5 // pred_check_branch
        %176 = sbr.rel (%p174) target = $region24
      $region23: #{tpu_custom_call.1} parent=5 // pred_region
        // Predicated region
        $region25: #{tpu_custom_call.1} parent=23 // pred_check
          %p177 = pneg %p50
        $region26: #{tpu_custom_call.1} parent=23 // pred_check_branch
          %179 = sbr.rel (%p177) target = $region28
        $region27: #{tpu_custom_call.1} parent=23 // pred_region
          %p180 = scmp.lt.s32.totalorder %s23, 1
          %s181 = scalar_select %p180, %s23, 1
          %p182 = scmp.lt.s32.totalorder %s24, 0
          %s183 = scalar_select %p182, %s24, 0
          %s184 = sadd.s32 %s183, %s181
          %s185 = smul.addr %s184, 4
          %s186 = scalar_lea.vmem %s0, %s185
        $region28: #{tpu_custom_call.1} parent=23 // pred_fallthru
          _
        // Predicated region
        $region29: #{tpu_custom_call.1} parent=23 // pred_check
          %p187 = pneg %p76
        $region30: #{tpu_custom_call.1} parent=23 // pred_check_branch
          %189 = sbr.rel (%p187) target = $region32
        $region31: #{tpu_custom_call.1} parent=23 // pred_region
          %s190 = sand.u32 %s66, 1
          %s191 = scalar_lea.sflag [#allocation3], %s190
          %s192 = sand.u32 %s66, 1
          %s193 = smul.addr %s192, 32
          %s194 = scalar_lea.vmem [#allocation2], %s193
          %s196 = ssub.s32 512, 512
          %197 = vsyncadd %s191, %s196
          %s198 = smul.addr %s23, 8
          %s199 = smul.addr %s198, 64
          %s200 = scalar_lea.hbm %s1, %s199
          %s201 = sshll.u32 %s194, 4
          %s202 = int_to_ptr.vmem [resolvable:$true] %s201
          %207 = dma.hbm_to_vmem [thread:$0]  %s200, 512, %s202, %s191, 128, 128, 8
        $region32: #{tpu_custom_call.1} parent=23 // pred_fallthru
          _
      $region24: #{tpu_custom_call.1} parent=5 // pred_fallthru
        _
      %p208 = scmp.le.s32.totalorder 1, %s16
      %p209 = scmp.lt.s32.totalorder %s16, 3
      %p210 = pnand %p208, %p209
      %p211 = pneg %p210
      // Predicated region
      $region33: #{tpu_custom_call.1} parent=5 // pred_check
        _
      $region34: #{tpu_custom_call.1} parent=5 // pred_check_branch
        %213 = sbr.rel (%p210) target = $region36
      $region35: #{tpu_custom_call.1} parent=5 // pred_region
        %s214 = ssub.s32 %s16, 1
        %s215 = sand.u32 %s69, 1
        %s216 = scalar_lea.sflag [#allocation3], %s215
        %s217 = sand.u32 %s69, 1
        %s218 = smul.addr %s217, 32
        %s219 = scalar_lea.vmem [#allocation2], %s218
        // Predicated region
        $region37: #{tpu_custom_call.1} parent=35 // pred_check
          %p220 = pneg %p82
        $region38: #{tpu_custom_call.1} parent=35 // pred_check_branch
          %222 = sbr.rel (%p220) target = $region40
        $region39: #{tpu_custom_call.1} parent=35 // pred_region
          %223 = dma.done %s216, 512
        $region40: #{tpu_custom_call.1} parent=35 // pred_fallthru
          _
        %p224 = scmp.lt.s32.totalorder %s25, 1
        %s225 = scalar_select %p224, %s25, 1
        %p226 = scmp.lt.s32.totalorder %s26, 0
        %s227 = scalar_select %p226, %s26, 0
        %s228 = sadd.s32 %s227, %s225
        %s229 = smul.addr %s228, 4
        %s230 = scalar_lea.vmem %s0, %s229
        %p231 = pneg %p56
        %p232 = pneg %p53
        %s233 = sand.u32 %s69, 1
        %s234 = scalar_lea.sflag [#allocation3], %s233
        %s235 = sand.u32 %s69, 1
        %s236 = smul.addr %s235, 32
        %s237 = scalar_lea.vmem [#allocation2], %s236
        %p238 = pneg %p82
        %p239 = pneg %p79
        %p240 = pneg %p103
        %p241 = pneg %p100
        %p242 = pneg %p124
        %p243 = pneg %p121
        %p244 = pneg %p152
        %p245 = pneg %p149
        %s246 = sand.u32 %s139, 1
        %s247 = scalar_lea.sflag [#allocation4], %s246
        %s248 = sand.u32 %s139, 1
        %s249 = smul.addr %s248, 32
        %s250 = scalar_lea.vmem [#allocation5], %s249
        %p251 = scmp.lt.s32.totalorder %s25, 1
        %s252 = scalar_select %p251, %s25, 1
        %p253 = scmp.lt.s32.totalorder %s26, 0
        %s254 = scalar_select %p253, %s26, 0
        %s255 = sadd.s32 %s254, %s252
        %s256 = smul.addr %s255, 4
        %s257 = scalar_lea.vmem %s0, %s256
        %v259 = vld [vmem:[%s257] sm:$0xf]
        %v260 = vld [vmem:[%s2] sm:$0x3]
        %v261 = vld [vmem:[%s3] sm:$0x1]
        %v263 = vlaneseq
        %v264 = vshrl.u32 %v263, 7
        %v265 = vsub.s32 0, %v264
        %v266 = vrot.slane %v261, %v265
        %vm268 = vcmask 31744
        %v270 = vsel %vm268, %v259, 0
        %vm272 = vcmask 1041408
        %v274 = vsel %vm272, %v260, 0
        %276 = vmatprep.subr.bf16.mxu0 0
        %277 = vmatpush1.bf16.msra.mxu0 0
        %278 = vmatprep.subr.bf16.mxu0 0
        %279 = vmatpush1.bf16.msra.mxu0 0
        %280 = vmatprep.subr.bf16.mxu0 0
        %281 = vmatpush1.bf16.msra.mxu0 0
        %282 = vmatprep.subr.bf16.mxu0 0
        %283 = vmatpush1.bf16.msra.mxu0 0
        %284 = vmatprep.subr.bf16.mxu0 0
        %285 = vmatpush1.bf16.msra.mxu0 0
        %286 = vmatprep.subr.bf16.mxu0 0
        %287 = vmatpush1.bf16.msra.mxu0 0
        %288 = vmatprep.subr.bf16.mxu0 0
        %289 = vmatpush1.bf16.msra.mxu0 0
        %290 = vmatprep.subr.bf16.mxu0 0
        %291 = vmatpush1.bf16.msra.mxu0 %v274
        %292 = vmatprep.subr.bf16.mxu0 0
        %293 = vmatpush2.bf16.msra.mxu0 0
        %294 = vmatprep.subr.bf16.mxu0 0
        %295 = vmatpush2.bf16.msra.mxu0 0
        %296 = vmatprep.subr.bf16.mxu0 0
        %297 = vmatpush2.bf16.msra.mxu0 0
        %298 = vmatprep.subr.bf16.mxu0 0
        %299 = vmatpush2.bf16.msra.mxu0 0
        %300 = vmatprep.subr.bf16.mxu0 0
        %301 = vmatpush2.bf16.msra.mxu0 0
        %302 = vmatprep.subr.bf16.mxu0 0
        %303 = vmatpush2.bf16.msra.mxu0 0
        %304 = vmatprep.subr.bf16.mxu0 0
        %305 = vmatpush2.bf16.msra.mxu0 0
        %306 = vmatprep.subr.bf16.mxu0 0
        %307 = vmatpush2.bf16.msra.mxu0 0
        %308 = vmatprep.mubr.bf16.mxu0 0
        %309 = vmatmul.mubr.bf16.gmra.mxu0 %v270
        %v310 = vpop.f32.mrf.mxu0
        %v311 = vadd.f32 %v266, %v310
        %v312 = vpop.f32.mrf.mxu0
        %v313 = vpop.f32.mrf.mxu0
        %v314 = vpop.f32.mrf.mxu0
        %315 = vdwg.mxu0
        %v316 = vpack.c.bf16 %v311, %v311
        %v317 = vld [vmem:[%s219] sm:$0xff]
        %v318 = vld [vmem:[%s219 + $0x8] sm:$0xff]
        %v321 = vunpack.c.l.b16 %v317
        %v322 = vunpack.c.h.b16 %v317
        %v323 = vunpack.c.l.b16 %v318
        %v324 = vunpack.c.h.b16 %v318
        %v325 = vpack.c.b16 %v323, %v321
        %v326 = vpack.c.b16 %v324, %v322
        %vm329 = vcmask 130048
        %v331 = vsel %vm329, %v316, 0
        %333 = vmatprep.subr.bf16.mxu0 0
        %334 = vmatpush1.bf16.msra.mxu0 0
        %335 = vmatprep.subr.bf16.mxu0 0
        %336 = vmatpush1.bf16.msra.mxu0 0
        %337 = vmatprep.subr.bf16.mxu0 0
        %338 = vmatpush1.bf16.msra.mxu0 0
        %339 = vmatprep.subr.bf16.mxu0 0
        %340 = vmatpush1.bf16.msra.mxu0 0
        %341 = vmatprep.subr.bf16.mxu0 0
        %342 = vmatpush1.bf16.msra.mxu0 0
        %343 = vmatprep.subr.bf16.mxu0 0
        %344 = vmatpush1.bf16.msra.mxu0 0
        %345 = vmatprep.subr.bf16.mxu0 0
        %346 = vmatpush1.bf16.msra.mxu0 0
        %347 = vmatprep.subr.bf16.mxu0 %v326
        %348 = vmatpush1.bf16.msra.mxu0 %v325
        %349 = vmatprep.subr.bf16.mxu0 0
        %350 = vmatpush2.bf16.msra.mxu0 0
        %351 = vmatprep.subr.bf16.mxu0 0
        %352 = vmatpush2.bf16.msra.mxu0 0
        %353 = vmatprep.subr.bf16.mxu0 0
        %354 = vmatpush2.bf16.msra.mxu0 0
        %355 = vmatprep.subr.bf16.mxu0 0
        %356 = vmatpush2.bf16.msra.mxu0 0
        %357 = vmatprep.subr.bf16.mxu0 0
        %358 = vmatpush2.bf16.msra.mxu0 0
        %359 = vmatprep.subr.bf16.mxu0 0
        %360 = vmatpush2.bf16.msra.mxu0 0
        %361 = vmatprep.subr.bf16.mxu0 0
        %362 = vmatpush2.bf16.msra.mxu0 0
        %363 = vmatprep.subr.bf16.mxu0 0
        %364 = vmatpush2.bf16.msra.mxu0 0
        %365 = vmatprep.mubr.bf16.mxu0 0
        %366 = vmatmul.mubr.bf16.gmra.mxu0 %v331
        %v367 = vpop.f32.mrf.mxu0
        %v368 = vadd.f32 0.0, %v367
        %v369 = vpop.f32.mrf.mxu0
        %v370 = vadd.f32 0.0, %v369
        %v371 = vpop.f32.mrf.mxu0
        %v372 = vpop.f32.mrf.mxu0
        %373 = vdwg.mxu0
        %v374 = vmax.f32 %v368, %v370
        %375 = vmax.xlane.f32.xlu0 %v374
        %v376 = vpop.xlane.xlu0 %375
        %v377 = vsub.f32 %v368, %v376
        %v378 = vsub.f32 %v370, %v376
        %v379 = vmul.f32 %v377, 1.442695
        %v380 = vpow.pop %v379
        %v381 = vmul.f32 %v378, 1.442695
        %v382 = vpow.pop %v381
        %v383 = vadd.f32 %v380, %v382
        %384 = vadd.xlane.f32.xlu0 %v383
        %v385 = vpop.xlane.xlu0 %384
        %386 = vst [vmem:[%s250] sm:$0xff] %v380
        %387 = vst [vmem:[%s250 + $0x8] sm:$0xff] %v382
        %s388 = scalar_lea.vmem %s2, 2
        %v389 = vld [vmem:[%s388] sm:$0x3]
        %s390 = scalar_lea.vmem %s3, 1
        %v391 = vld [vmem:[%s390] sm:$0x1]
        %v393 = vlaneseq
        %v394 = vshrl.u32 %v393, 7
        %v395 = vsub.s32 0, %v394
        %v396 = vrot.slane %v391, %v395
        %v399 = vsel %vm272, %v389, 0
        %401 = vmatprep.subr.bf16.mxu0 0
        %402 = vmatpush1.bf16.msra.mxu0 0
        %403 = vmatprep.subr.bf16.mxu0 0
        %404 = vmatpush1.bf16.msra.mxu0 0
        %405 = vmatprep.subr.bf16.mxu0 0
        %406 = vmatpush1.bf16.msra.mxu0 0
        %407 = vmatprep.subr.bf16.mxu0 0
        %408 = vmatpush1.bf16.msra.mxu0 0
        %409 = vmatprep.subr.bf16.mxu0 0
        %410 = vmatpush1.bf16.msra.mxu0 0
        %411 = vmatprep.subr.bf16.mxu0 0
        %412 = vmatpush1.bf16.msra.mxu0 0
        %413 = vmatprep.subr.bf16.mxu0 0
        %414 = vmatpush1.bf16.msra.mxu0 0
        %415 = vmatprep.subr.bf16.mxu0 0
        %416 = vmatpush1.bf16.msra.mxu0 %v399
        %417 = vmatprep.subr.bf16.mxu0 0
        %418 = vmatpush2.bf16.msra.mxu0 0
        %419 = vmatprep.subr.bf16.mxu0 0
        %420 = vmatpush2.bf16.msra.mxu0 0
        %421 = vmatprep.subr.bf16.mxu0 0
        %422 = vmatpush2.bf16.msra.mxu0 0
        %423 = vmatprep.subr.bf16.mxu0 0
        %424 = vmatpush2.bf16.msra.mxu0 0
        %425 = vmatprep.subr.bf16.mxu0 0
        %426 = vmatpush2.bf16.msra.mxu0 0
        %427 = vmatprep.subr.bf16.mxu0 0
        %428 = vmatpush2.bf16.msra.mxu0 0
        %429 = vmatprep.subr.bf16.mxu0 0
        %430 = vmatpush2.bf16.msra.mxu0 0
        %431 = vmatprep.subr.bf16.mxu0 0
        %432 = vmatpush2.bf16.msra.mxu0 0
        %433 = vmatprep.mubr.bf16.mxu0 0
        %434 = vmatmul.mubr.bf16.gmra.mxu0 %v270
        %v435 = vpop.f32.mrf.mxu0
        %v436 = vadd.f32 %v396, %v435
        %v437 = vpop.f32.mrf.mxu0
        %v438 = vpop.f32.mrf.mxu0
        %v439 = vpop.f32.mrf.mxu0
        %440 = vdwg.mxu0
        %v441 = vpack.c.bf16 %v436, %v436
        %s442 = scalar_lea.vmem %s219, 16 [#allocation2]
        %v443 = vld [vmem:[%s442] sm:$0xff]
        %v444 = vld [vmem:[%s442 + $0x8] sm:$0xff]
        %v447 = vunpack.c.l.b16 %v443
        %v448 = vunpack.c.h.b16 %v443
        %v449 = vunpack.c.l.b16 %v444
        %v450 = vunpack.c.h.b16 %v444
        %v451 = vpack.c.b16 %v449, %v447
        %v452 = vpack.c.b16 %v450, %v448
        %v456 = vsel %vm329, %v441, 0
        %458 = vmatprep.subr.bf16.mxu0 0
        %459 = vmatpush1.bf16.msra.mxu0 0
        %460 = vmatprep.subr.bf16.mxu0 0
        %461 = vmatpush1.bf16.msra.mxu0 0
        %462 = vmatprep.subr.bf16.mxu0 0
        %463 = vmatpush1.bf16.msra.mxu0 0
        %464 = vmatprep.subr.bf16.mxu0 0
        %465 = vmatpush1.bf16.msra.mxu0 0
        %466 = vmatprep.subr.bf16.mxu0 0
        %467 = vmatpush1.bf16.msra.mxu0 0
        %468 = vmatprep.subr.bf16.mxu0 0
        %469 = vmatpush1.bf16.msra.mxu0 0
        %470 = vmatprep.subr.bf16.mxu0 0
        %471 = vmatpush1.bf16.msra.mxu0 0
        %472 = vmatprep.subr.bf16.mxu0 %v452
        %473 = vmatpush1.bf16.msra.mxu0 %v451
        %474 = vmatprep.subr.bf16.mxu0 0
        %475 = vmatpush2.bf16.msra.mxu0 0
        %476 = vmatprep.subr.bf16.mxu0 0
        %477 = vmatpush2.bf16.msra.mxu0 0
        %478 = vmatprep.subr.bf16.mxu0 0
        %479 = vmatpush2.bf16.msra.mxu0 0
        %480 = vmatprep.subr.bf16.mxu0 0
        %481 = vmatpush2.bf16.msra.mxu0 0
        %482 = vmatprep.subr.bf16.mxu0 0
        %483 = vmatpush2.bf16.msra.mxu0 0
        %484 = vmatprep.subr.bf16.mxu0 0
        %485 = vmatpush2.bf16.msra.mxu0 0
        %486 = vmatprep.subr.bf16.mxu0 0
        %487 = vmatpush2.bf16.msra.mxu0 0
        %488 = vmatprep.subr.bf16.mxu0 0
        %489 = vmatpush2.bf16.msra.mxu0 0
        %490 = vmatprep.mubr.bf16.mxu0 0
        %491 = vmatmul.mubr.bf16.gmra.mxu0 %v456
        %v492 = vpop.f32.mrf.mxu0
        %v493 = vadd.f32 0.0, %v492
        %v494 = vpop.f32.mrf.mxu0
        %v495 = vadd.f32 0.0, %v494
        %v496 = vpop.f32.mrf.mxu0
        %v497 = vpop.f32.mrf.mxu0
        %498 = vdwg.mxu0
        %v499 = vmax.f32 %v493, %v495
        %500 = vmax.xlane.f32.xlu0 %v499
        %v501 = vpop.xlane.xlu0 %500
        %v502 = vsub.f32 %v493, %v501
        %v503 = vsub.f32 %v495, %v501
        %v504 = vmul.f32 %v502, 1.442695
        %v505 = vpow.pop %v504
        %v506 = vmul.f32 %v503, 1.442695
        %v507 = vpow.pop %v506
        %v508 = vadd.f32 %v505, %v507
        %509 = vadd.xlane.f32.xlu0 %v508
        %v510 = vpop.xlane.xlu0 %509
        %511 = vst [vmem:[%s250 + $0x10] sm:$0xff] %v505
        %512 = vst [vmem:[%s250 + $0x18] sm:$0xff] %v507
        %v513 = vmax.f32 %v376, %v501
        %v514 = vsub.f32 %v376, %v513
        %v515 = vmul.f32 %v514, 1.442695
        %v516 = vpow.pop %v515
        %v517 = vsub.f32 %v501, %v513
        %v518 = vmul.f32 %v517, 1.442695
        %v519 = vpow.pop %v518
        %v520 = vmul.f32 %v516, %v385
        %v521 = vmul.f32 %v519, %v510
        %v522 = vadd.f32 %v520, %v521
        %v523 = vrcp.pop %v522
        %v524 = vmul.f32 %v516, %v523
        %v525 = vld [vmem:[%s250] sm:$0xff]
        %v526 = vld [vmem:[%s250 + $0x8] sm:$0xff]
        %v527 = vmul.f32 %v525, %v524
        %v528 = vmul.f32 %v526, %v524
        %529 = vst [vmem:[%s250] sm:$0xff] %v527
        %530 = vst [vmem:[%s250 + $0x8] sm:$0xff] %v528
        %v531 = vmul.f32 %v519, %v523
        %v532 = vld [vmem:[%s250 + $0x10] sm:$0xff]
        %v533 = vld [vmem:[%s250 + $0x18] sm:$0xff]
        %v534 = vmul.f32 %v532, %v531
        %v535 = vmul.f32 %v533, %v531
        %536 = vst [vmem:[%s250 + $0x10] sm:$0xff] %v534
        %537 = vst [vmem:[%s250 + $0x18] sm:$0xff] %v535
        %s538 = sand.u32 %s139, 1
        %s539 = scalar_lea.sflag [#allocation4], %s538
        %s540 = sand.u32 %s139, 1
        %s541 = smul.addr %s540, 32
        %s542 = scalar_lea.vmem [#allocation5], %s541
        // Predicated region
        $region41: #{tpu_custom_call.1} parent=35 // pred_check
          %p543 = pneg %p149
        $region42: #{tpu_custom_call.1} parent=35 // pred_check_branch
          %545 = sbr.rel (%p543) target = $region44
        $region43: #{tpu_custom_call.1} parent=35 // pred_region
          %s547 = ssub.s32 512, 512
          %548 = vsyncadd %s539, %s547
          %s549 = smul.addr %s26, 4
          %s550 = smul.addr %s25, 4
          %s551 = sadd.s32 %s549, %s550
          %s552 = smul.addr %s551, 128
          %s553 = scalar_lea.hbm %s4, %s552
          %s555 = sshll.u32 %s542, 4
          %s556 = int_to_ptr.vmem [resolvable:$true] %s555
          %558 = dma.vmem_to_hbm [thread:$0]  %s556, 512, %s553, %s539
        $region44: #{tpu_custom_call.1} parent=35 // pred_fallthru
          _
      $region36: #{tpu_custom_call.1} parent=5 // pred_fallthru
        _
      %p559 = scmp.le.s32.totalorder 2, %s16
      // Predicated region
      $region45: #{tpu_custom_call.1} parent=5 // pred_check
        %p560 = pneg %p559
      $region46: #{tpu_custom_call.1} parent=5 // pred_check_branch
        %562 = sbr.rel (%p560) target = $region48
      $region47: #{tpu_custom_call.1} parent=5 // pred_region
        %s563 = ssub.s32 %s16, 2
        // Predicated region
        $region49: #{tpu_custom_call.1} parent=47 // pred_check
          %p564 = pneg %p155
        $region50: #{tpu_custom_call.1} parent=47 // pred_check_branch
          %566 = sbr.rel (%p564) target = $region52
        $region51: #{tpu_custom_call.1} parent=47 // pred_region
          %s567 = sand.u32 %s140, 1
          %s568 = scalar_lea.sflag [#allocation4], %s567
          %s569 = sand.u32 %s140, 1
          %s570 = smul.addr %s569, 32
          %s571 = scalar_lea.vmem [#allocation5], %s570
          %572 = dma.done %s568, 512
        $region52: #{tpu_custom_call.1} parent=47 // pred_fallthru
          _
      $region48: #{tpu_custom_call.1} parent=5 // pred_fallthru
        _
    $region6: #{tpu_custom_call.1} parent=1 // loop_footer
      %s20 = sadd.s32 1, %s16
    $region7: #{tpu_custom_call.1} parent=1 // loop_footer_branch
      %15 = sbr.rel target = $region3
    $region8: #{tpu_custom_call.1} parent=1 // loop_exit
      _
    %573 = vsyncpa [#allocation3], 1
    %s574 = scalar_lea.sflag [#allocation3], 1
    %575 = vsyncpa %s574, 1
    %576 = vsyncpa [#allocation4], 1
    %s577 = scalar_lea.sflag [#allocation4], 1
    %578 = vsyncpa %s577, 1

</llo_original>
